<compile_context>
chip_gen: v7x
topology: tpu7x:2x2x1
jax: 0.10.0
libtpu: 0.0.40
codegen_flags: <defaults>
</compile_context>

<pallas_src>
import functools

import jax
import jax.numpy as jnp
from jax.experimental import pallas as pl
from jax.experimental.pallas import tpu as pltpu


def _round_up(n, m):
    return ((n + m - 1) // m) * m


def _activation(name, x):
    if name == "relu":
        return jnp.maximum(x, 0.0)
    elif name == "leaky":
        return jnp.where(x >= 0.0, x, 0.01 * x)
    elif name == "sigmoid":
        return jax.nn.sigmoid(x)
    elif name == "tanh":
        return jnp.tanh(x)
    elif name == "gelu":
        # PyTorch nn.GELU defaults to the exact erf form.
        return jax.nn.gelu(x, approximate=False)
    else:
        # unknown activation -> identity (PyTorch module appends no layer)
        return x


def mlp_kernel(x_ref, *refs, nonlinearity, n_hidden):
    """Whole MLP for one (block_batch, in_pad) tile of x.

    refs = (w1, b1, ..., wH, bH, w_last_row, b_last, out_ref)
      wi         : (in_pad_i, out_pad_i) f32
      bi         : (1, out_pad_i)        f32
      w_last_row : (1, last_hidden_pad)  f32   (final weight stored as a row)
      b_last     : (1, 1)                f32
      out_ref    : (1, block_batch)      f32   (lane-dense output row)
    """
    out_ref = refs[-1]
    param_refs = refs[:-1]

    h = x_ref[...]  # (bb, in_pad), already f32 -> no redundant converts
    for layer in range(n_hidden):
        w = param_refs[2 * layer][...]
        b = param_refs[2 * layer + 1][...]
        h = jnp.dot(h, w, preferred_element_type=jnp.float32) + b
        h = _activation(nonlinearity, h)

    w_row = param_refs[2 * n_hidden][...]       # (1, hid_pad)
    b_last = param_refs[2 * n_hidden + 1][...]  # (1, 1)
    # Final Linear (out_features == 1), produced directly lane-dense:
    #   (1, Hpad) @ (Hpad, bb) -> (1, bb).  The h.T relayout uses the XLU slot.
    y = jnp.dot(w_row, h.T, preferred_element_type=jnp.float32) + b_last
    out_ref[...] = y.astype(out_ref.dtype)


def net_forward(x, params, nonlinearity, block_batch=256):
    """params: list of (W, b); W shape (in, out), b shape (out,).
    Final layer must have out == 1 (matches the PyTorch Net)."""
    batch, input_dim = x.shape
    n_layers = len(params)
    n_hidden = n_layers - 1
    assert params[-1][0].shape[1] == 1

    # ---- tiling: lane-dense output needs block_batch % 128 == 0 ------------
    block_batch = max(128, min(block_batch, _round_up(batch, 128)))
    batch_pad = _round_up(batch, block_batch)
    num_blocks = batch_pad // block_batch

    # ---- pad feature dims to multiples of 128 -------------------------------
    dims = [input_dim] + [w.shape[1] for (w, _) in params]   # [..., 1]
    pad_dims = [_round_up(d, 128) for d in dims[:-1]]         # final out stays 1

    x_p = jnp.zeros((batch_pad, pad_dims[0]), jnp.float32)
    x_p = x_p.at[:batch, :input_dim].set(x.astype(jnp.float32))

    flat_params = []
    in_specs = [pl.BlockSpec((block_batch, pad_dims[0]), lambda i: (i, 0))]

    for l in range(n_hidden):
        w, b = params[l]
        wp = jnp.zeros((pad_dims[l], pad_dims[l + 1]), jnp.float32)
        wp = wp.at[: w.shape[0], : w.shape[1]].set(w.astype(jnp.float32))
        bp = jnp.zeros((1, pad_dims[l + 1]), jnp.float32)
        bp = bp.at[:, : w.shape[1]].set(jnp.reshape(b, (1, -1)).astype(jnp.float32))
        flat_params += [wp, bp]
        in_specs += [
            pl.BlockSpec(wp.shape, lambda i: (0, 0)),
            pl.BlockSpec(bp.shape, lambda i: (0, 0)),
        ]

    w_last, b_last = params[-1]
    w_row = jnp.zeros((1, pad_dims[-1]), jnp.float32)
    w_row = w_row.at[:, : w_last.shape[0]].set(
        jnp.reshape(w_last, (1, -1)).astype(jnp.float32)
    )
    b_sc = jnp.reshape(b_last, (1, 1)).astype(jnp.float32)
    flat_params += [w_row, b_sc]
    in_specs += [
        pl.BlockSpec(w_row.shape, lambda i: (0, 0)),
        pl.BlockSpec(b_sc.shape, lambda i: (0, 0)),
    ]

    # Lane-dense output: one (1, block_batch) row per grid step.
    out_shape = jax.ShapeDtypeStruct((num_blocks, 1, block_batch), jnp.float32)
    out_specs = pl.BlockSpec((None, 1, block_batch), lambda i: (i, 0, 0))

    # ---- advisory cost estimate for the XLA scheduler ------------------------
    all_dims = pad_dims + [1]
    flops = 2 * batch_pad * sum(all_dims[i] * all_dims[i + 1] for i in range(n_layers))
    transc = batch_pad * sum(pad_dims[1:]) if nonlinearity in ("sigmoid", "tanh", "gelu") else 0
    bytes_accessed = x_p.size * 4 + sum(p.size * 4 for p in flat_params) + batch_pad * 4

    kernel = functools.partial(mlp_kernel, nonlinearity=nonlinearity, n_hidden=n_hidden)

    z = pl.pallas_call(
        kernel,
        out_shape=out_shape,
        grid_spec=pltpu.PrefetchScalarGridSpec(
            num_scalar_prefetch=0,
            grid=(num_blocks,),
            in_specs=in_specs,
            out_specs=out_specs,
        ),
        compiler_params=pltpu.CompilerParams(
            dimension_semantics=("parallel",),
            vmem_limit_bytes=32 * 1024 * 1024,
        ),
        cost_estimate=pl.CostEstimate(
            flops=flops, transcendentals=transc, bytes_accessed=bytes_accessed
        ),
    )(x_p, *flat_params)

    # (num_blocks, 1, block_batch) -> flat, drop batch padding.  This is the
    # z.flatten() of the PyTorch module.
    return z.reshape(-1)[:batch]


def init_params(key, input_dim, hidden_dims):
    """PyTorch nn.Linear-style init: U(-1/sqrt(fan_in), 1/sqrt(fan_in))."""
    dims = [input_dim] + list(hidden_dims) + [1]
    params = []
    for i in range(len(dims) - 1):
        fan_in, fan_out = dims[i], dims[i + 1]
        key, kw, kb = jax.random.split(key, 3)
        bound = 1.0 / (fan_in ** 0.5)
        w = jax.random.uniform(kw, (fan_in, fan_out), jnp.float32, -bound, bound)
        b = jax.random.uniform(kb, (fan_out,), jnp.float32, -bound, bound)
        params.append((w, b))
    return params


def reference_forward(x, params, nonlinearity):
    h = x.astype(jnp.float32)
    for i, (w, b) in enumerate(params):
        h = h @ w + b
        if i < len(params) - 1:
            h = _activation(nonlinearity, h)
    return h.reshape(-1)


if __name__ == "__main__":
    input_dim = 16
    hidden_dims = [32, 32]
    nonlinearity = "tanh"
    batch = 16

    key = jax.random.PRNGKey(0)
    key, kx = jax.random.split(key)
    x = jax.random.normal(kx, (batch, input_dim), dtype=jnp.float32)

    params = init_params(key, input_dim, hidden_dims)

    z = net_forward(x, params, nonlinearity, block_batch=256)
    z = jax.block_until_ready(z)

    z_ref = reference_forward(x, params, nonlinearity)
    assert z.shape == (batch,)
    assert jnp.allclose(z, z_ref, atol=1e-5, rtol=1e-5), (z, z_ref)

    print("KERNEL_OK")
</pallas_src>

<mosaic_0001>
module attributes {stable_mosaic.version = 11 : i64} {
  func.func @mlp_kernel(%arg0: i32, %arg1: memref<128x128xf32, #tpu.memory_space<vmem>>, %arg2: memref<128x128xf32, #tpu.memory_space<vmem>>, %arg3: memref<1x128xf32, #tpu.memory_space<vmem>>, %arg4: memref<128x128xf32, #tpu.memory_space<vmem>>, %arg5: memref<1x128xf32, #tpu.memory_space<vmem>>, %arg6: memref<1x128xf32, #tpu.memory_space<vmem>>, %arg7: memref<1x1xf32, #tpu.memory_space<vmem>>, %arg8: memref<1x1x128xf32, #tpu.memory_space<vmem>>) attributes {dimension_semantics = [#tpu.dimension_semantics<parallel>], iteration_bounds = array<i64: 1>, scalar_prefetch = 0 : i64, scratch_operands = 0 : i64, tpu.core_type = #tpu.core_type<tc>, window_params = [{transform_indices = @transform_0, window_bounds = array<i64: 128, 128>}, {pipeline_mode = #tpu.pipeline_mode<synchronous>, transform_indices = @transform_1, window_bounds = array<i64: 128, 128>}, {pipeline_mode = #tpu.pipeline_mode<synchronous>, transform_indices = @transform_2, window_bounds = array<i64: 1, 128>}, {pipeline_mode = #tpu.pipeline_mode<synchronous>, transform_indices = @transform_3, window_bounds = array<i64: 128, 128>}, {pipeline_mode = #tpu.pipeline_mode<synchronous>, transform_indices = @transform_4, window_bounds = array<i64: 1, 128>}, {pipeline_mode = #tpu.pipeline_mode<synchronous>, transform_indices = @transform_5, window_bounds = array<i64: 1, 128>}, {pipeline_mode = #tpu.pipeline_mode<synchronous>, transform_indices = @transform_6, window_bounds = array<i64: 1, 1>}, {transform_indices = @transform_7, window_bounds = array<i64: 1, 1, 128>}]} {
    %c0 = arith.constant 0 : index
    %c0_0 = arith.constant 0 : index
    %0 = vector.load %arg1[%c0, %c0_0] : memref<128x128xf32, #tpu.memory_space<vmem>>, vector<128x128xf32>
    %c0_1 = arith.constant 0 : index
    %c0_2 = arith.constant 0 : index
    %1 = vector.load %arg2[%c0_1, %c0_2] : memref<128x128xf32, #tpu.memory_space<vmem>>, vector<128x128xf32>
    %c0_3 = arith.constant 0 : index
    %c0_4 = arith.constant 0 : index
    %2 = vector.load %arg3[%c0_3, %c0_4] : memref<1x128xf32, #tpu.memory_space<vmem>>, vector<1x128xf32>
    %cst = arith.constant dense<0.000000e+00> : vector<128x128xf32>
    %3 = tpu.matmul %0, %1, %cst {dimension_numbers = #tpu.dot_dimension_numbers<[1], [0], [0], [1], [0, 0, 1, 1], [], []>} : vector<128x128xf32>, vector<128x128xf32>, vector<128x128xf32> -> vector<128x128xf32>
    %4 = vector.broadcast %2 : vector<1x128xf32> to vector<128x128xf32>
    %5 = arith.addf %3, %4 : vector<128x128xf32>
    %6 = math.tanh %5 : vector<128x128xf32>
    %c0_5 = arith.constant 0 : index
    %c0_6 = arith.constant 0 : index
    %7 = vector.load %arg4[%c0_5, %c0_6] : memref<128x128xf32, #tpu.memory_space<vmem>>, vector<128x128xf32>
    %c0_7 = arith.constant 0 : index
    %c0_8 = arith.constant 0 : index
    %8 = vector.load %arg5[%c0_7, %c0_8] : memref<1x128xf32, #tpu.memory_space<vmem>>, vector<1x128xf32>
    %cst_9 = arith.constant dense<0.000000e+00> : vector<128x128xf32>
    %9 = tpu.matmul %6, %7, %cst_9 {dimension_numbers = #tpu.dot_dimension_numbers<[1], [0], [0], [1], [0, 0, 1, 1], [], []>} : vector<128x128xf32>, vector<128x128xf32>, vector<128x128xf32> -> vector<128x128xf32>
    %10 = vector.broadcast %8 : vector<1x128xf32> to vector<128x128xf32>
    %11 = arith.addf %9, %10 : vector<128x128xf32>
    %12 = math.tanh %11 : vector<128x128xf32>
    %c0_10 = arith.constant 0 : index
    %c0_11 = arith.constant 0 : index
    %13 = vector.load %arg6[%c0_10, %c0_11] : memref<1x128xf32, #tpu.memory_space<vmem>>, vector<1x128xf32>
    %c0_12 = arith.constant 0 : index
    %c0_13 = arith.constant 0 : index
    %14 = vector.load %arg7[%c0_12, %c0_13] : memref<1x1xf32, #tpu.memory_space<vmem>>, vector<1x1xf32>
    %15 = tpu.transpose %12, [1, 0] : vector<128x128xf32> -> vector<128x128xf32>
    %cst_14 = arith.constant dense<0.000000e+00> : vector<1x128xf32>
    %16 = tpu.matmul %13, %15, %cst_14 {dimension_numbers = #tpu.dot_dimension_numbers<[1], [0], [0], [1], [0, 0, 1, 1], [], []>} : vector<1x128xf32>, vector<128x128xf32>, vector<1x128xf32> -> vector<1x128xf32>
    %17 = vector.broadcast %14 : vector<1x1xf32> to vector<1x128xf32>
    %18 = arith.addf %16, %17 : vector<1x128xf32>
    %c0_15 = arith.constant 0 : index
    %c0_16 = arith.constant 0 : index
    %c0_17 = arith.constant 0 : index
    %19 = vector.load %arg8[%c0_15, %c0_16, %c0_17] : memref<1x1x128xf32, #tpu.memory_space<vmem>>, vector<1x1x128xf32>
    %20 = vector.shape_cast %19 : vector<1x1x128xf32> to vector<1x128xf32>
    %21 = vector.shape_cast %18 : vector<1x128xf32> to vector<1x1x128xf32>
    tpu.vector_store %arg8[%c0_15, %c0_16, %c0_17], %21 {strides = array<i32>} : memref<1x1x128xf32, #tpu.memory_space<vmem>>, vector<1x1x128xf32>,
    return
  }
  func.func @transform_0(%arg0: i32) -> (i32, i32) {
    %c0_i32 = arith.constant 0 : i32
    %c0_i32_0 = arith.constant 0 : i32
    return %arg0, %c0_i32 : i32, i32
  }
  func.func @transform_1(%arg0: i32) -> (i32, i32) {
    %c0_i32 = arith.constant 0 : i32
    %c0_i32_0 = arith.constant 0 : i32
    %c0_i32_1 = arith.constant 0 : i32
    return %c0_i32, %c0_i32_0 : i32, i32
  }
  func.func @transform_2(%arg0: i32) -> (i32, i32) {
    %c0_i32 = arith.constant 0 : i32
    %c0_i32_0 = arith.constant 0 : i32
    %c0_i32_1 = arith.constant 0 : i32
    return %c0_i32, %c0_i32_0 : i32, i32
  }
  func.func @transform_3(%arg0: i32) -> (i32, i32) {
    %c0_i32 = arith.constant 0 : i32
    %c0_i32_0 = arith.constant 0 : i32
    %c0_i32_1 = arith.constant 0 : i32
    return %c0_i32, %c0_i32_0 : i32, i32
  }
  func.func @transform_4(%arg0: i32) -> (i32, i32) {
    %c0_i32 = arith.constant 0 : i32
    %c0_i32_0 = arith.constant 0 : i32
    %c0_i32_1 = arith.constant 0 : i32
    return %c0_i32, %c0_i32_0 : i32, i32
  }
  func.func @transform_5(%arg0: i32) -> (i32, i32) {
    %c0_i32 = arith.constant 0 : i32
    %c0_i32_0 = arith.constant 0 : i32
    %c0_i32_1 = arith.constant 0 : i32
    return %c0_i32, %c0_i32_0 : i32, i32
  }
  func.func @transform_6(%arg0: i32) -> (i32, i32) {
    %c0_i32 = arith.constant 0 : i32
    %c0_i32_0 = arith.constant 0 : i32
    %c0_i32_1 = arith.constant 0 : i32
    return %c0_i32, %c0_i32_0 : i32, i32
  }
  func.func @transform_7(%arg0: i32) -> (i32, i32, i32) {
    %c0_i32 = arith.constant 0 : i32
    %c0_i32_0 = arith.constant 0 : i32
    %c0_i32_1 = arith.constant 0 : i32
    return %arg0, %c0_i32, %c0_i32_0 : i32, i32, i32
  }
}

</mosaic_0001>

<llo_original>
// kernel: tpu_custom_call.1
$region0: #{tpu_custom_call.1}
  #allocation0 [shape = 'u32[]', space=smem, size = 0x4, offset = 0x4, fixed_abs, tag = 'smem constant byte address 0x4 - core index']
  #allocation1 [shape = 'u32[144,128]{1,0:T(1,128)}', space=vmem, size = 0x12000, scoped, tag = 'internal scratch']
  #allocation2 [shape = 'f32[1,1]{1,0:T(1,128)S(1)}', space=vmem, size = 0x200, scoped, tag = 'scoped memory for tpu_custom_call.1']
  %s0 = inlined_call_operand.hbm [shape: f32[128,128], index: 0, kind: input, shape index: {}]
  %s1 = inlined_call_operand.hbm [shape: f32[128,128], index: 1, kind: input, shape index: {}]
  %s2 = inlined_call_operand.vmem [shape: f32[1,128], index: 2, kind: input, shape index: {}]
  %s3 = inlined_call_operand.hbm [shape: f32[128,128], index: 3, kind: input, shape index: {}]
  %s4 = inlined_call_operand.vmem [shape: f32[1,128], index: 4, kind: input, shape index: {}]
  %s5 = inlined_call_operand.vmem [shape: f32[1,128], index: 5, kind: input, shape index: {}]
  %s6 = inlined_call_operand.<no memory space> [shape: f32[1,1], index: 6, kind: input, shape index: {}]
  %s7 = inlined_call_operand.hbm [shape: f32[1,1,128], index: 7, kind: output, shape index: {}]
  %s8 = sld [smem:[#allocation0]]
  $region50: #{tpu_custom_call.1} parent=0
    _
  %s10 = ssub.s32 1, %s8
  %s11 = scalar_select 0, %s10, %s8
  %v12 = vstv %s6
  %13 = vst [vmem:[#allocation2] sm:$0x1] %v12
  $region1: #{tpu_custom_call.1} parent=0
    #allocation3 [shape = 'u8[65536]{0}', space=vmem, size = 0x10000, scoped, tag = 'input window, operand 0, single buffered']
    #allocation4 [shape = 's32[1]{0}', space=sflag, size = 0x4, scoped, tag = 'scoped memory for tpu_custom_call.1']
    #allocation5 [shape = 's32[1]{0}', space=sflag, size = 0x4, scoped, tag = 'scoped memory for tpu_custom_call.1']
    #allocation6 [shape = 'u8[65536]{0}', space=vmem, size = 0x10000, scoped, tag = 'input window, operand 1, single buffered']
    #allocation7 [shape = 's32[1]{0}', space=sflag, size = 0x4, scoped, tag = 'scoped memory for tpu_custom_call.1']
    #allocation8 [shape = 'u8[65536]{0}', space=vmem, size = 0x10000, scoped, tag = 'input window, operand 3, single buffered']
    #allocation9 [shape = 'u8[512]{0}', space=vmem, size = 0x400, scoped, tag = 'output window, operand 0, single buffered']
    %14 = vsyncpa [#allocation4], 0
    %15 = vsyncpa [#allocation7], 0
    %16 = vsyncpa [#allocation5], 0
    // Predicated region
    $region2: #{tpu_custom_call.1} parent=1 // pred_check
      _
    $region3: #{tpu_custom_call.1} parent=1 // pred_check_branch
      %18 = sbr.rel (0) target = $region5
    $region4: #{tpu_custom_call.1} parent=1 // pred_region
      %s20 = ssub.s32 2048, 2048
      %21 = vsyncadd [#allocation4], %s20
      %s22 = sshll.u32 [#allocation3], 4
      %s23 = int_to_ptr.vmem [resolvable:$true] %s22
      %28 = dma.hbm_to_vmem [thread:$0]  %s0, 2048, %s23, [#allocation4], 128, 128, 8
    $region5: #{tpu_custom_call.1} parent=1 // pred_fallthru
      _
    // Predicated region
    $region6: #{tpu_custom_call.1} parent=1 // pred_check
      _
    $region7: #{tpu_custom_call.1} parent=1 // pred_check_branch
      %30 = sbr.rel (0) target = $region9
    $region8: #{tpu_custom_call.1} parent=1 // pred_region
      %s32 = ssub.s32 2048, 2048
      %33 = vsyncadd [#allocation7], %s32
      %s34 = sshll.u32 [#allocation6], 4
      %s35 = int_to_ptr.vmem [resolvable:$true] %s34
      %40 = dma.hbm_to_vmem [thread:$0]  %s1, 2048, %s35, [#allocation7], 128, 128, 8
    $region9: #{tpu_custom_call.1} parent=1 // pred_fallthru
      _
    // Predicated region
    $region10: #{tpu_custom_call.1} parent=1 // pred_check
      _
    $region11: #{tpu_custom_call.1} parent=1 // pred_check_branch
      %42 = sbr.rel (0) target = $region13
    $region12: #{tpu_custom_call.1} parent=1 // pred_region
      _
    $region13: #{tpu_custom_call.1} parent=1 // pred_fallthru
      _
    // Predicated region
    $region14: #{tpu_custom_call.1} parent=1 // pred_check
      _
    $region15: #{tpu_custom_call.1} parent=1 // pred_check_branch
      %44 = sbr.rel (0) target = $region17
    $region16: #{tpu_custom_call.1} parent=1 // pred_region
      %s46 = ssub.s32 2048, 2048
      %47 = vsyncadd [#allocation7], %s46
      %s48 = sshll.u32 [#allocation8], 4
      %s49 = int_to_ptr.vmem [resolvable:$true] %s48
      %54 = dma.hbm_to_vmem [thread:$0]  %s3, 2048, %s49, [#allocation7], 128, 128, 8
    $region17: #{tpu_custom_call.1} parent=1 // pred_fallthru
      _
    // Predicated region
    $region18: #{tpu_custom_call.1} parent=1 // pred_check
      _
    $region19: #{tpu_custom_call.1} parent=1 // pred_check_branch
      %56 = sbr.rel (0) target = $region21
    $region20: #{tpu_custom_call.1} parent=1 // pred_region
      _
    $region21: #{tpu_custom_call.1} parent=1 // pred_fallthru
      _
    // Predicated region
    $region22: #{tpu_custom_call.1} parent=1 // pred_check
      _
    $region23: #{tpu_custom_call.1} parent=1 // pred_check_branch
      %58 = sbr.rel (0) target = $region25
    $region24: #{tpu_custom_call.1} parent=1 // pred_region
      _
    $region25: #{tpu_custom_call.1} parent=1 // pred_fallthru
      _
    // Predicated region
    $region26: #{tpu_custom_call.1} parent=1 // pred_check
      _
    $region27: #{tpu_custom_call.1} parent=1 // pred_check_branch
      %60 = sbr.rel (0) target = $region29
    $region28: #{tpu_custom_call.1} parent=1 // pred_region
      _
    $region29: #{tpu_custom_call.1} parent=1 // pred_fallthru
      _
    // Predicated region
    $region30: #{tpu_custom_call.1} parent=1 // pred_check
      _
    $region31: #{tpu_custom_call.1} parent=1 // pred_check_branch
      %62 = sbr.rel (0) target = $region33
    $region32: #{tpu_custom_call.1} parent=1 // pred_region
      %63 = dma.done [#allocation4], 2048
    $region33: #{tpu_custom_call.1} parent=1 // pred_fallthru
      _
    // Predicated region
    $region34: #{tpu_custom_call.1} parent=1 // pred_check
      _
    $region35: #{tpu_custom_call.1} parent=1 // pred_check_branch
      %65 = sbr.rel (0) target = $region37
    $region36: #{tpu_custom_call.1} parent=1 // pred_region
      %66 = dma.done [#allocation7], 2048
    $region37: #{tpu_custom_call.1} parent=1 // pred_fallthru
      _
    // Predicated region
    $region38: #{tpu_custom_call.1} parent=1 // pred_check
      _
    $region39: #{tpu_custom_call.1} parent=1 // pred_check_branch
      %68 = sbr.rel (0) target = $region41
    $region40: #{tpu_custom_call.1} parent=1 // pred_region
      %69 = dma.done [#allocation7], 2048
    $region41: #{tpu_custom_call.1} parent=1 // pred_fallthru
      _
    %v70 = vld [vmem:[#allocation3] sm:$0xff]
    %v71 = vld [vmem:[#allocation3 + $0x8] sm:$0xff]
    %v72 = vld [vmem:[#allocation3 + $0x10] sm:$0xff]
    %v73 = vld [vmem:[#allocation3 + $0x18] sm:$0xff]
    %v74 = vld [vmem:[#allocation3 + $0x20] sm:$0xff]
    %v75 = vld [vmem:[#allocation3 + $0x28] sm:$0xff]
    %v76 = vld [vmem:[#allocation3 + $0x30] sm:$0xff]
    %v77 = vld [vmem:[#allocation3 + $0x38] sm:$0xff]
    %v78 = vld [vmem:[#allocation3 + $0x40] sm:$0xff]
    %v79 = vld [vmem:[#allocation3 + $0x48] sm:$0xff]
    %v80 = vld [vmem:[#allocation3 + $0x50] sm:$0xff]
    %v81 = vld [vmem:[#allocation3 + $0x58] sm:$0xff]
    %v82 = vld [vmem:[#allocation3 + $0x60] sm:$0xff]
    %v83 = vld [vmem:[#allocation3 + $0x68] sm:$0xff]
    %v84 = vld [vmem:[#allocation3 + $0x70] sm:$0xff]
    %v85 = vld [vmem:[#allocation3 + $0x78] sm:$0xff]
    %v86 = vld [vmem:[#allocation6] sm:$0xff]
    %v87 = vld [vmem:[#allocation6 + $0x8] sm:$0xff]
    %v88 = vld [vmem:[#allocation6 + $0x10] sm:$0xff]
    %v89 = vld [vmem:[#allocation6 + $0x18] sm:$0xff]
    %v90 = vld [vmem:[#allocation6 + $0x20] sm:$0xff]
    %v91 = vld [vmem:[#allocation6 + $0x28] sm:$0xff]
    %v92 = vld [vmem:[#allocation6 + $0x30] sm:$0xff]
    %v93 = vld [vmem:[#allocation6 + $0x38] sm:$0xff]
    %v94 = vld [vmem:[#allocation6 + $0x40] sm:$0xff]
    %v95 = vld [vmem:[#allocation6 + $0x48] sm:$0xff]
    %v96 = vld [vmem:[#allocation6 + $0x50] sm:$0xff]
    %v97 = vld [vmem:[#allocation6 + $0x58] sm:$0xff]
    %v98 = vld [vmem:[#allocation6 + $0x60] sm:$0xff]
    %v99 = vld [vmem:[#allocation6 + $0x68] sm:$0xff]
    %v100 = vld [vmem:[#allocation6 + $0x70] sm:$0xff]
    %v101 = vld [vmem:[#allocation6 + $0x78] sm:$0xff]
    %v102 = vld [vmem:[%s2] sm:$0x1]
    %v104 = vlaneseq
    %v105 = vshrl.u32 %v104, 7
    %v106 = vsub.s32 0, %v105
    %v107 = vrot.slane %v102, %v106
    %109 = vmatprep.subr.mxu0 0.0
    %110 = vmatpush1.msra.mxu0 %v86
    %111 = vmatprep.subr.mxu0 0.0
    %112 = vmatpush1.msra.mxu0 %v87
    %113 = vmatprep.subr.mxu0 0.0
    %114 = vmatpush1.msra.mxu0 %v88
    %115 = vmatprep.subr.mxu0 0.0
    %116 = vmatpush1.msra.mxu0 %v89
    %117 = vmatprep.subr.mxu0 0.0
    %118 = vmatpush1.msra.mxu0 %v90
    %119 = vmatprep.subr.mxu0 0.0
    %120 = vmatpush1.msra.mxu0 %v91
    %121 = vmatprep.subr.mxu0 0.0
    %122 = vmatpush1.msra.mxu0 %v92
    %123 = vmatprep.subr.mxu0 0.0
    %124 = vmatpush1.msra.mxu0 %v93
    %125 = vmatprep.subr.mxu0 0.0
    %126 = vmatpush1.msra.mxu0 %v94
    %127 = vmatprep.subr.mxu0 0.0
    %128 = vmatpush1.msra.mxu0 %v95
    %129 = vmatprep.subr.mxu0 0.0
    %130 = vmatpush1.msra.mxu0 %v96
    %131 = vmatprep.subr.mxu0 0.0
    %132 = vmatpush1.msra.mxu0 %v97
    %133 = vmatprep.subr.mxu0 0.0
    %134 = vmatpush1.msra.mxu0 %v98
    %135 = vmatprep.subr.mxu0 0.0
    %136 = vmatpush1.msra.mxu0 %v99
    %137 = vmatprep.subr.mxu0 0.0
    %138 = vmatpush1.msra.mxu0 %v100
    %139 = vmatprep.subr.mxu0 0.0
    %140 = vmatpush1.msra.mxu0 %v101
    %141 = vmatprep.subr.mxu0 0.0
    %142 = vmatpush1.msra.mxu0 0.0
    %143 = vmatprep.subr.mxu0 0.0
    %144 = vmatpush1.msra.mxu0 0.0
    %145 = vmatprep.subr.mxu0 0.0
    %146 = vmatpush1.msra.mxu0 0.0
    %147 = vmatprep.subr.mxu0 0.0
    %148 = vmatpush1.msra.mxu0 0.0
    %149 = vmatprep.subr.mxu0 0.0
    %150 = vmatpush1.msra.mxu0 0.0
    %151 = vmatprep.subr.mxu0 0.0
    %152 = vmatpush1.msra.mxu0 0.0
    %153 = vmatprep.subr.mxu0 0.0
    %154 = vmatpush1.msra.mxu0 0.0
    %155 = vmatprep.subr.mxu0 0.0
    %156 = vmatpush1.msra.mxu0 0.0
    %157 = vmatprep.subr.mxu0 0.0
    %158 = vmatpush1.msra.mxu0 0.0
    %159 = vmatprep.subr.mxu0 0.0
    %160 = vmatpush1.msra.mxu0 0.0
    %161 = vmatprep.subr.mxu0 0.0
    %162 = vmatpush1.msra.mxu0 0.0
    %163 = vmatprep.subr.mxu0 0.0
    %164 = vmatpush1.msra.mxu0 0.0
    %165 = vmatprep.subr.mxu0 0.0
    %166 = vmatpush1.msra.mxu0 0.0
    %167 = vmatprep.subr.mxu0 0.0
    %168 = vmatpush1.msra.mxu0 0.0
    %169 = vmatprep.subr.mxu0 0.0
    %170 = vmatpush1.msra.mxu0 0.0
    %171 = vmatprep.subr.mxu0 0.0
    %172 = vmatpush1.msra.mxu0 0.0
    %173 = vmatprep.mubr.f32.mxu0 0.0
    %174 = vmatmul.mubr.f32.gmra.mrb[0].mxu0 %v70
    %v175 = vpop.f32.mrb[0].mxu0
    %v176 = vadd.f32 %v107, %v175
    %v177 = vpop.f32.mrb[0].mxu0
    %178 = vmatprep.mubr.f32.mxu0 0.0
    %179 = vmatmul.mubr.f32.gmra.mrb[0].mxu0 %v71
    %v180 = vpop.f32.mrb[0].mxu0
    %v181 = vadd.f32 %v107, %v180
    %v182 = vpop.f32.mrb[0].mxu0
    %183 = vmatprep.mubr.f32.mxu0 0.0
    %184 = vmatmul.mubr.f32.gmra.mrb[0].mxu0 %v72
    %v185 = vpop.f32.mrb[0].mxu0
    %v186 = vadd.f32 %v107, %v185
    %v187 = vpop.f32.mrb[0].mxu0
    %188 = vmatprep.mubr.f32.mxu0 0.0
    %189 = vmatmul.mubr.f32.gmra.mrb[0].mxu0 %v73
    %v190 = vpop.f32.mrb[0].mxu0
    %v191 = vadd.f32 %v107, %v190
    %v192 = vpop.f32.mrb[0].mxu0
    %193 = vmatprep.mubr.f32.mxu0 0.0
    %194 = vmatmul.mubr.f32.gmra.mrb[0].mxu0 %v74
    %v195 = vpop.f32.mrb[0].mxu0
    %v196 = vadd.f32 %v107, %v195
    %v197 = vpop.f32.mrb[0].mxu0
    %198 = vmatprep.mubr.f32.mxu0 0.0
    %199 = vmatmul.mubr.f32.gmra.mrb[0].mxu0 %v75
    %v200 = vpop.f32.mrb[0].mxu0
    %v201 = vadd.f32 %v107, %v200
    %v202 = vpop.f32.mrb[0].mxu0
    %203 = vmatprep.mubr.f32.mxu0 0.0
    %204 = vmatmul.mubr.f32.gmra.mrb[0].mxu0 %v76
    %v205 = vpop.f32.mrb[0].mxu0
    %v206 = vadd.f32 %v107, %v205
    %v207 = vpop.f32.mrb[0].mxu0
    %208 = vmatprep.mubr.f32.mxu0 0.0
    %209 = vmatmul.mubr.f32.gmra.mrb[0].mxu0 %v77
    %v210 = vpop.f32.mrb[0].mxu0
    %v211 = vadd.f32 %v107, %v210
    %v212 = vpop.f32.mrb[0].mxu0
    %213 = vmatprep.mubr.f32.mxu0 0.0
    %214 = vmatmul.mubr.f32.gmra.mrb[0].mxu0 %v78
    %v215 = vpop.f32.mrb[0].mxu0
    %v216 = vadd.f32 %v107, %v215
    %v217 = vpop.f32.mrb[0].mxu0
    %218 = vmatprep.mubr.f32.mxu0 0.0
    %219 = vmatmul.mubr.f32.gmra.mrb[0].mxu0 %v79
    %v220 = vpop.f32.mrb[0].mxu0
    %v221 = vadd.f32 %v107, %v220
    %v222 = vpop.f32.mrb[0].mxu0
    %223 = vmatprep.mubr.f32.mxu0 0.0
    %224 = vmatmul.mubr.f32.gmra.mrb[0].mxu0 %v80
    %v225 = vpop.f32.mrb[0].mxu0
    %v226 = vadd.f32 %v107, %v225
    %v227 = vpop.f32.mrb[0].mxu0
    %228 = vmatprep.mubr.f32.mxu0 0.0
    %229 = vmatmul.mubr.f32.gmra.mrb[0].mxu0 %v81
    %v230 = vpop.f32.mrb[0].mxu0
    %v231 = vadd.f32 %v107, %v230
    %v232 = vpop.f32.mrb[0].mxu0
    %233 = vmatprep.mubr.f32.mxu0 0.0
    %234 = vmatmul.mubr.f32.gmra.mrb[0].mxu0 %v82
    %v235 = vpop.f32.mrb[0].mxu0
    %v236 = vadd.f32 %v107, %v235
    %v237 = vpop.f32.mrb[0].mxu0
    %238 = vmatprep.mubr.f32.mxu0 0.0
    %239 = vmatmul.mubr.f32.gmra.mrb[0].mxu0 %v83
    %v240 = vpop.f32.mrb[0].mxu0
    %v241 = vadd.f32 %v107, %v240
    %v242 = vpop.f32.mrb[0].mxu0
    %243 = vmatprep.mubr.f32.mxu0 0.0
    %244 = vmatmul.mubr.f32.gmra.mrb[0].mxu0 %v84
    %v245 = vpop.f32.mrb[0].mxu0
    %v246 = vadd.f32 %v107, %v245
    %v247 = vpop.f32.mrb[0].mxu0
    %248 = vmatprep.mubr.f32.mxu0 0.0
    %249 = vmatmul.mubr.f32.gmra.mrb[0].mxu0 %v85
    %v250 = vpop.f32.mrb[0].mxu0
    %v251 = vadd.f32 %v107, %v250
    %v252 = vpop.f32.mrb[0].mxu0
    %253 = vdwg.mxu0
    %v254 = vtanh.pop %v176
    %v255 = vtanh.pop %v181
    %v256 = vtanh.pop %v186
    %v257 = vtanh.pop %v191
    %v258 = vtanh.pop %v196
    %v259 = vtanh.pop %v201
    %v260 = vtanh.pop %v206
    %v261 = vtanh.pop %v211
    %v262 = vtanh.pop %v216
    %v263 = vtanh.pop %v221
    %v264 = vtanh.pop %v226
    %v265 = vtanh.pop %v231
    %v266 = vtanh.pop %v236
    %v267 = vtanh.pop %v241
    %v268 = vtanh.pop %v246
    %v269 = vtanh.pop %v251
    %v270 = vld [vmem:[#allocation8] sm:$0xff]
    %v271 = vld [vmem:[#allocation8 + $0x8] sm:$0xff]
    %v272 = vld [vmem:[#allocation8 + $0x10] sm:$0xff]
    %v273 = vld [vmem:[#allocation8 + $0x18] sm:$0xff]
    %v274 = vld [vmem:[#allocation8 + $0x20] sm:$0xff]
    %v275 = vld [vmem:[#allocation8 + $0x28] sm:$0xff]
    %v276 = vld [vmem:[#allocation8 + $0x30] sm:$0xff]
    %v277 = vld [vmem:[#allocation8 + $0x38] sm:$0xff]
    %v278 = vld [vmem:[#allocation8 + $0x40] sm:$0xff]
    %v279 = vld [vmem:[#allocation8 + $0x48] sm:$0xff]
    %v280 = vld [vmem:[#allocation8 + $0x50] sm:$0xff]
    %v281 = vld [vmem:[#allocation8 + $0x58] sm:$0xff]
    %v282 = vld [vmem:[#allocation8 + $0x60] sm:$0xff]
    %v283 = vld [vmem:[#allocation8 + $0x68] sm:$0xff]
    %v284 = vld [vmem:[#allocation8 + $0x70] sm:$0xff]
    %v285 = vld [vmem:[#allocation8 + $0x78] sm:$0xff]
    %v286 = vld [vmem:[%s4] sm:$0x1]
    %v288 = vlaneseq
    %v289 = vshrl.u32 %v288, 7
    %v290 = vsub.s32 0, %v289
    %v291 = vrot.slane %v286, %v290
    %293 = vmatprep.subr.mxu0 0.0
    %294 = vmatpush1.msra.mxu0 %v270
    %295 = vmatprep.subr.mxu0 0.0
    %296 = vmatpush1.msra.mxu0 %v271
    %297 = vmatprep.subr.mxu0 0.0
    %298 = vmatpush1.msra.mxu0 %v272
    %299 = vmatprep.subr.mxu0 0.0
    %300 = vmatpush1.msra.mxu0 %v273
    %301 = vmatprep.subr.mxu0 0.0
    %302 = vmatpush1.msra.mxu0 %v274
    %303 = vmatprep.subr.mxu0 0.0
    %304 = vmatpush1.msra.mxu0 %v275
    %305 = vmatprep.subr.mxu0 0.0
    %306 = vmatpush1.msra.mxu0 %v276
    %307 = vmatprep.subr.mxu0 0.0
    %308 = vmatpush1.msra.mxu0 %v277
    %309 = vmatprep.subr.mxu0 0.0
    %310 = vmatpush1.msra.mxu0 %v278
    %311 = vmatprep.subr.mxu0 0.0
    %312 = vmatpush1.msra.mxu0 %v279
    %313 = vmatprep.subr.mxu0 0.0
    %314 = vmatpush1.msra.mxu0 %v280
    %315 = vmatprep.subr.mxu0 0.0
    %316 = vmatpush1.msra.mxu0 %v281
    %317 = vmatprep.subr.mxu0 0.0
    %318 = vmatpush1.msra.mxu0 %v282
    %319 = vmatprep.subr.mxu0 0.0
    %320 = vmatpush1.msra.mxu0 %v283
    %321 = vmatprep.subr.mxu0 0.0
    %322 = vmatpush1.msra.mxu0 %v284
    %323 = vmatprep.subr.mxu0 0.0
    %324 = vmatpush1.msra.mxu0 %v285
    %325 = vmatprep.subr.mxu0 0.0
    %326 = vmatpush1.msra.mxu0 0.0
    %327 = vmatprep.subr.mxu0 0.0
    %328 = vmatpush1.msra.mxu0 0.0
    %329 = vmatprep.subr.mxu0 0.0
    %330 = vmatpush1.msra.mxu0 0.0
    %331 = vmatprep.subr.mxu0 0.0
    %332 = vmatpush1.msra.mxu0 0.0
    %333 = vmatprep.subr.mxu0 0.0
    %334 = vmatpush1.msra.mxu0 0.0
    %335 = vmatprep.subr.mxu0 0.0
    %336 = vmatpush1.msra.mxu0 0.0
    %337 = vmatprep.subr.mxu0 0.0
    %338 = vmatpush1.msra.mxu0 0.0
    %339 = vmatprep.subr.mxu0 0.0
    %340 = vmatpush1.msra.mxu0 0.0
    %341 = vmatprep.subr.mxu0 0.0
    %342 = vmatpush1.msra.mxu0 0.0
    %343 = vmatprep.subr.mxu0 0.0
    %344 = vmatpush1.msra.mxu0 0.0
    %345 = vmatprep.subr.mxu0 0.0
    %346 = vmatpush1.msra.mxu0 0.0
    %347 = vmatprep.subr.mxu0 0.0
    %348 = vmatpush1.msra.mxu0 0.0
    %349 = vmatprep.subr.mxu0 0.0
    %350 = vmatpush1.msra.mxu0 0.0
    %351 = vmatprep.subr.mxu0 0.0
    %352 = vmatpush1.msra.mxu0 0.0
    %353 = vmatprep.subr.mxu0 0.0
    %354 = vmatpush1.msra.mxu0 0.0
    %355 = vmatprep.subr.mxu0 0.0
    %356 = vmatpush1.msra.mxu0 0.0
    %357 = vmatprep.mubr.f32.mxu0 0.0
    %358 = vmatmul.mubr.f32.gmra.mrb[0].mxu0 %v254
    %v359 = vpop.f32.mrb[0].mxu0
    %v360 = vadd.f32 %v291, %v359
    %v361 = vpop.f32.mrb[0].mxu0
    %362 = vmatprep.mubr.f32.mxu0 0.0
    %363 = vmatmul.mubr.f32.gmra.mrb[0].mxu0 %v255
    %v364 = vpop.f32.mrb[0].mxu0
    %v365 = vadd.f32 %v291, %v364
    %v366 = vpop.f32.mrb[0].mxu0
    %367 = vmatprep.mubr.f32.mxu0 0.0
    %368 = vmatmul.mubr.f32.gmra.mrb[0].mxu0 %v256
    %v369 = vpop.f32.mrb[0].mxu0
    %v370 = vadd.f32 %v291, %v369
    %v371 = vpop.f32.mrb[0].mxu0
    %372 = vmatprep.mubr.f32.mxu0 0.0
    %373 = vmatmul.mubr.f32.gmra.mrb[0].mxu0 %v257
    %v374 = vpop.f32.mrb[0].mxu0
    %v375 = vadd.f32 %v291, %v374
    %v376 = vpop.f32.mrb[0].mxu0
    %377 = vmatprep.mubr.f32.mxu0 0.0
    %378 = vmatmul.mubr.f32.gmra.mrb[0].mxu0 %v258
    %v379 = vpop.f32.mrb[0].mxu0
    %v380 = vadd.f32 %v291, %v379
    %v381 = vpop.f32.mrb[0].mxu0
    %382 = vmatprep.mubr.f32.mxu0 0.0
    %383 = vmatmul.mubr.f32.gmra.mrb[0].mxu0 %v259
    %v384 = vpop.f32.mrb[0].mxu0
    %v385 = vadd.f32 %v291, %v384
    %v386 = vpop.f32.mrb[0].mxu0
    %387 = vmatprep.mubr.f32.mxu0 0.0
    %388 = vmatmul.mubr.f32.gmra.mrb[0].mxu0 %v260
    %v389 = vpop.f32.mrb[0].mxu0
    %v390 = vadd.f32 %v291, %v389
    %v391 = vpop.f32.mrb[0].mxu0
    %392 = vmatprep.mubr.f32.mxu0 0.0
    %393 = vmatmul.mubr.f32.gmra.mrb[0].mxu0 %v261
    %v394 = vpop.f32.mrb[0].mxu0
    %v395 = vadd.f32 %v291, %v394
    %v396 = vpop.f32.mrb[0].mxu0
    %397 = vmatprep.mubr.f32.mxu0 0.0
    %398 = vmatmul.mubr.f32.gmra.mrb[0].mxu0 %v262
    %v399 = vpop.f32.mrb[0].mxu0
    %v400 = vadd.f32 %v291, %v399
    %v401 = vpop.f32.mrb[0].mxu0
    %402 = vmatprep.mubr.f32.mxu0 0.0
    %403 = vmatmul.mubr.f32.gmra.mrb[0].mxu0 %v263
    %v404 = vpop.f32.mrb[0].mxu0
    %v405 = vadd.f32 %v291, %v404
    %v406 = vpop.f32.mrb[0].mxu0
    %407 = vmatprep.mubr.f32.mxu0 0.0
    %408 = vmatmul.mubr.f32.gmra.mrb[0].mxu0 %v264
    %v409 = vpop.f32.mrb[0].mxu0
    %v410 = vadd.f32 %v291, %v409
    %v411 = vpop.f32.mrb[0].mxu0
    %412 = vmatprep.mubr.f32.mxu0 0.0
    %413 = vmatmul.mubr.f32.gmra.mrb[0].mxu0 %v265
    %v414 = vpop.f32.mrb[0].mxu0
    %v415 = vadd.f32 %v291, %v414
    %v416 = vpop.f32.mrb[0].mxu0
    %417 = vmatprep.mubr.f32.mxu0 0.0
    %418 = vmatmul.mubr.f32.gmra.mrb[0].mxu0 %v266
    %v419 = vpop.f32.mrb[0].mxu0
    %v420 = vadd.f32 %v291, %v419
    %v421 = vpop.f32.mrb[0].mxu0
    %422 = vmatprep.mubr.f32.mxu0 0.0
    %423 = vmatmul.mubr.f32.gmra.mrb[0].mxu0 %v267
    %v424 = vpop.f32.mrb[0].mxu0
    %v425 = vadd.f32 %v291, %v424
    %v426 = vpop.f32.mrb[0].mxu0
    %427 = vmatprep.mubr.f32.mxu0 0.0
    %428 = vmatmul.mubr.f32.gmra.mrb[0].mxu0 %v268
    %v429 = vpop.f32.mrb[0].mxu0
    %v430 = vadd.f32 %v291, %v429
    %v431 = vpop.f32.mrb[0].mxu0
    %432 = vmatprep.mubr.f32.mxu0 0.0
    %433 = vmatmul.mubr.f32.gmra.mrb[0].mxu0 %v269
    %v434 = vpop.f32.mrb[0].mxu0
    %v435 = vadd.f32 %v291, %v434
    %v436 = vpop.f32.mrb[0].mxu0
    %437 = vdwg.mxu0
    %v438 = vtanh.pop %v360
    %v439 = vtanh.pop %v365
    %v440 = vtanh.pop %v370
    %v441 = vtanh.pop %v375
    %v442 = vtanh.pop %v380
    %v443 = vtanh.pop %v385
    %v444 = vtanh.pop %v390
    %v445 = vtanh.pop %v395
    %v446 = vtanh.pop %v400
    %v447 = vtanh.pop %v405
    %v448 = vtanh.pop %v410
    %v449 = vtanh.pop %v415
    %v450 = vtanh.pop %v420
    %v451 = vtanh.pop %v425
    %v452 = vtanh.pop %v430
    %v453 = vtanh.pop %v435
    %v454 = vld [vmem:[%s5] sm:$0x1]
    %v455 = vld [vmem:[#allocation2] sm:$0x1]
    %457 = vset.pattern.permute.xlu0 0
    %458 = vperm.xlu0 %457, %v455
    %v459 = vpop.permute.xlu0 %458
    %v461 = vlaneseq
    %v462 = vshrl.u32 %v461, 7
    %v463 = vsub.s32 0, %v462
    %v464 = vrot.slane %v459, %v463
    %465 = vmatprep.subr.mxu0 0.0
    %466 = vmatpush1.xpose.msra.mxu0 %v438
    %467 = vmatprep.subr.mxu0 0.0
    %468 = vmatpush1.xpose.msra.mxu0 %v439
    %469 = vmatprep.subr.mxu0 0.0
    %470 = vmatpush1.xpose.msra.mxu0 %v440
    %471 = vmatprep.subr.mxu0 0.0
    %472 = vmatpush1.xpose.msra.mxu0 %v441
    %473 = vmatprep.subr.mxu0 0.0
    %474 = vmatpush1.xpose.msra.mxu0 %v442
    %475 = vmatprep.subr.mxu0 0.0
    %476 = vmatpush1.xpose.msra.mxu0 %v443
    %477 = vmatprep.subr.mxu0 0.0
    %478 = vmatpush1.xpose.msra.mxu0 %v444
    %479 = vmatprep.subr.mxu0 0.0
    %480 = vmatpush1.xpose.msra.mxu0 %v445
    %481 = vmatprep.subr.mxu0 0.0
    %482 = vmatpush1.xpose.msra.mxu0 %v446
    %483 = vmatprep.subr.mxu0 0.0
    %484 = vmatpush1.xpose.msra.mxu0 %v447
    %485 = vmatprep.subr.mxu0 0.0
    %486 = vmatpush1.xpose.msra.mxu0 %v448
    %487 = vmatprep.subr.mxu0 0.0
    %488 = vmatpush1.xpose.msra.mxu0 %v449
    %489 = vmatprep.subr.mxu0 0.0
    %490 = vmatpush1.xpose.msra.mxu0 %v450
    %491 = vmatprep.subr.mxu0 0.0
    %492 = vmatpush1.xpose.msra.mxu0 %v451
    %493 = vmatprep.subr.mxu0 0.0
    %494 = vmatpush1.xpose.msra.mxu0 %v452
    %495 = vmatprep.subr.mxu0 0.0
    %496 = vmatpush1.xpose.msra.mxu0 %v453
    %497 = vmatprep.subr.mxu0 0.0
    %498 = vmatpush1.xpose.msra.mxu0 0.0
    %499 = vmatprep.subr.mxu0 0.0
    %500 = vmatpush1.xpose.msra.mxu0 0.0
    %501 = vmatprep.subr.mxu0 0.0
    %502 = vmatpush1.xpose.msra.mxu0 0.0
    %503 = vmatprep.subr.mxu0 0.0
    %504 = vmatpush1.xpose.msra.mxu0 0.0
    %505 = vmatprep.subr.mxu0 0.0
    %506 = vmatpush1.xpose.msra.mxu0 0.0
    %507 = vmatprep.subr.mxu0 0.0
    %508 = vmatpush1.xpose.msra.mxu0 0.0
    %509 = vmatprep.subr.mxu0 0.0
    %510 = vmatpush1.xpose.msra.mxu0 0.0
    %511 = vmatprep.subr.mxu0 0.0
    %512 = vmatpush1.xpose.msra.mxu0 0.0
    %513 = vmatprep.subr.mxu0 0.0
    %514 = vmatpush1.xpose.msra.mxu0 0.0
    %515 = vmatprep.subr.mxu0 0.0
    %516 = vmatpush1.xpose.msra.mxu0 0.0
    %517 = vmatprep.subr.mxu0 0.0
    %518 = vmatpush1.xpose.msra.mxu0 0.0
    %519 = vmatprep.subr.mxu0 0.0
    %520 = vmatpush1.xpose.msra.mxu0 0.0
    %521 = vmatprep.subr.mxu0 0.0
    %522 = vmatpush1.xpose.msra.mxu0 0.0
    %523 = vmatprep.subr.mxu0 0.0
    %524 = vmatpush1.xpose.msra.mxu0 0.0
    %525 = vmatprep.subr.mxu0 0.0
    %526 = vmatpush1.xpose.msra.mxu0 0.0
    %527 = vmatprep.subr.mxu0 0.0
    %528 = vmatpush1.xpose.msra.mxu0 0.0
    %529 = vmatprep.mubr.f32.mxu0 0.0
    %530 = vmatmul.mubr.f32.gmra.mrb[0].mxu0 %v454
    %v531 = vpop.f32.mrb[0].mxu0
    %v532 = vadd.f32 %v464, %v531
    %v533 = vpop.f32.mrb[0].mxu0
    %534 = vdwg.mxu0
    %535 = vst [vmem:[#allocation9] sm:$0x1] %v532
    // Predicated region
    $region42: #{tpu_custom_call.1} parent=1 // pred_check
      _
    $region43: #{tpu_custom_call.1} parent=1 // pred_check_branch
      %537 = sbr.rel (0) target = $region45
    $region44: #{tpu_custom_call.1} parent=1 // pred_region
      %s539 = ssub.s32 16, 16
      %540 = vsyncadd [#allocation5], %s539
      %s542 = sshll.u32 [#allocation9], 4
      %s543 = int_to_ptr.vmem [resolvable:$true] %s542
      %545 = dma.vmem_to_hbm [thread:$0]  %s543, 16, %s7, [#allocation5]
    $region45: #{tpu_custom_call.1} parent=1 // pred_fallthru
      _
    // Predicated region
    $region46: #{tpu_custom_call.1} parent=1 // pred_check
      _
    $region47: #{tpu_custom_call.1} parent=1 // pred_check_branch
      %547 = sbr.rel (0) target = $region49
    $region48: #{tpu_custom_call.1} parent=1 // pred_region
      %548 = dma.done [#allocation5], 16
    $region49: #{tpu_custom_call.1} parent=1 // pred_fallthru
      _
    %549 = vsyncpa [#allocation4], 1
    %550 = vsyncpa [#allocation7], 1
    %551 = vsyncpa [#allocation5], 1

</llo_original>
